<compile_context>
chip_gen: v6e
topology: v6e:2x2x1
jax: 0.10.0
libtpu: 0.0.40
codegen_flags: <defaults>
</compile_context>

<pallas_src>
import functools

import jax
import jax.numpy as jnp
from jax.experimental import pallas as pl
from jax.experimental.pallas import tpu as pltpu


def _rmsnorm_kernel(x_ref, w_ref, o_ref, *, eps: float, inv_d: float,
                    pack: int, d_model: int):
    """Normalize every length-d_model segment of each block row.

    pack == 1: one logical row per block row (standard path).
    pack >  1: `pack` original rows are packed side-by-side into one 128-lane
               row; per-segment mean-squares are computed with static lane
               slices + XLU reductions (exact f32), keeping loads/stores
               lane-dense.
    """
    x = x_ref[...].astype(jnp.float32)            # (tm, pack*d_model)
    w = w_ref[...].astype(jnp.float32)            # (1,  pack*d_model)
    sq = x * x
    if pack == 1:
        ms = jnp.sum(sq, axis=-1, keepdims=True) * inv_d       # (tm, 1)
        scale = jax.lax.rsqrt(ms + eps)                         # EUP, per row
    else:
        parts = []
        for j in range(pack):                                   # static loop
            sq_j = sq[:, j * d_model:(j + 1) * d_model]         # (tm, d)
            ms_j = jnp.sum(sq_j, axis=-1, keepdims=True) * inv_d
            parts.append(jnp.broadcast_to(jax.lax.rsqrt(ms_j + eps), sq_j.shape))
        scale = jnp.concatenate(parts, axis=-1)                 # (tm, pack*d)
    o_ref[...] = (x * scale * w).astype(o_ref.dtype)


def _vmem_plan() -> tuple[int, int]:
    """(tile-sizing budget, scoped vmem limit) sized to this chip's VMEM."""
    cap = 64 * 1024 * 1024                       # conservative default (v7x)
    try:
        cap = int(pltpu.get_tpu_info().vmem_capacity_bytes)
    except Exception:
        pass
    if cap >= 100 * 1024 * 1024:                 # v5e / v6e: 128 MiB per core
        return 44 * 1024 * 1024, 88 * 1024 * 1024
    return cap // 4, int(cap * 0.625)            # v7x 64 MiB -> 16 / 40 MiB


def _choose_tm(row_width: int, itemsize: int, vmem_budget_bytes: int) -> int:
    # Double-buffered native-dtype in + out blocks, plus ~3 f32-wide live
    # temporaries inside the kernel (cast x, x*x, scaled product).
    bytes_per_row = 4 * row_width * itemsize + 3 * row_width * 4
    tm = vmem_budget_bytes // bytes_per_row
    tm = int(max(8, min(tm, 1024)))
    return tm - tm % 8


def _apply_grid_floor(tm: int, rows: int) -> int:
    """Keep >= 4 grid steps (pipelining + both v7x TCs) and prefer an even
    step count. tm stays a multiple of 8 (sublane requirement when tm < rows)."""
    tm = max(8, tm - tm % 8)
    cap = (rows // 4) - (rows // 4) % 8
    if cap >= 8:
        tm = min(tm, cap)
    steps = pl.cdiv(rows, tm)
    if steps % 2:
        tm2 = ((pl.cdiv(rows, steps + 1) + 7) // 8) * 8
        if 8 <= tm2 <= tm and pl.cdiv(rows, tm2) % 2 == 0:
            tm = tm2
    return tm


def rmsnorm(x: jax.Array, weight: jax.Array, eps: float, *,
            tm: int | None = None) -> jax.Array:
    orig_shape = x.shape
    d_model = orig_shape[-1]
    x2d = x.reshape(-1, d_model)
    n_rows = x2d.shape[0]
    itemsize = jnp.dtype(x.dtype).itemsize

    # Lane-dense repack: pack k = 128 // d_model rows side-by-side so output
    # stores are full-lane (unmasked).
    pack = 1
    if d_model < 128 and 128 % d_model == 0:
        k = 128 // d_model
        if n_rows % k == 0:
            pack = k

    rows = n_rows // pack
    row_w = pack * d_model
    xk = x2d.reshape(rows, row_w)                                   # free
    wk = (jnp.tile(weight, pack) if pack > 1 else weight).reshape(1, row_w)

    budget, vmem_limit = _vmem_plan()
    if tm is None:
        if rows <= 64:
            # Tiny input: single block == full array dims (no (8,128)
            # divisibility constraint); pipelining irrelevant at this size.
            tm = rows
        else:
            tm = _choose_tm(row_w, itemsize, budget)
            tm = _apply_grid_floor(tm, rows)
    else:
        tm = min(tm, rows)

    grid = (pl.cdiv(rows, tm),)

    kernel = functools.partial(
        _rmsnorm_kernel, eps=float(eps), inv_d=1.0 / float(d_model),
        pack=pack, d_model=d_model)

    cost = pl.CostEstimate(
        flops=4 * n_rows * d_model,
        transcendentals=n_rows,
        bytes_accessed=2 * n_rows * d_model * itemsize + d_model * itemsize)

    out = pl.pallas_call(
        kernel,
        out_shape=jax.ShapeDtypeStruct((rows, row_w), x.dtype),
        grid_spec=pltpu.PrefetchScalarGridSpec(
            num_scalar_prefetch=0,
            grid=grid,
            in_specs=[
                pl.BlockSpec((tm, row_w), lambda i: (i, 0)),
                # Weight: constant block index -> DMA'd once, kept resident.
                pl.BlockSpec((1, row_w), lambda i: (0, 0)),
            ],
            out_specs=pl.BlockSpec((tm, row_w), lambda i: (i, 0)),
        ),
        compiler_params=pltpu.CompilerParams(
            dimension_semantics=("parallel",),
            vmem_limit_bytes=vmem_limit,
        ),
        cost_estimate=cost,
    )(xk, wk)

    return out.reshape(orig_shape)


def rmsnorm_ref(x, weight, eps):
    ms = jnp.sum(x * x, axis=-1) / x.shape[-1]
    rms = jnp.sqrt(ms + eps)
    return x / rms[..., None] * weight


if __name__ == "__main__":
    d_model = 32
    eps = 1e-5
    batch, seq = 2, 8

    key = jax.random.PRNGKey(0)
    kx, kw, kx2 = jax.random.split(key, 3)
    x = jax.random.normal(kx, (batch, seq, d_model), dtype=jnp.float32)
    # deterministic synthetic weight (nn.Parameter(torch.empty(d_model)) shape)
    weight = jax.random.normal(kw, (d_model,), dtype=jnp.float32)

    out = jax.block_until_ready(rmsnorm(x, weight, eps))   # lane-dense packed path
    ref = rmsnorm_ref(x, weight, eps)
    assert out.shape == x.shape and out.dtype == x.dtype
    assert jnp.allclose(out, ref, atol=1e-5, rtol=1e-5)

    # Exercise the non-packable / ragged-last-block path (15 rows, not a
    # multiple of 128//32 = 4, explicit small tile).
    x2 = jax.random.normal(kx2, (3, 5, d_model), dtype=jnp.float32)
    out2 = jax.block_until_ready(rmsnorm(x2, weight, eps, tm=8))
    ref2 = rmsnorm_ref(x2, weight, eps)
    assert jnp.allclose(out2, ref2, atol=1e-5, rtol=1e-5)

    print("KERNEL_OK")
</pallas_src>

<mosaic_0001>
module attributes {stable_mosaic.version = 11 : i64} {
  func.func @_rmsnorm_kernel(%arg0: i32, %arg1: memref<4x128xf32, #tpu.memory_space<vmem>>, %arg2: memref<1x128xf32, #tpu.memory_space<vmem>>, %arg3: memref<4x128xf32, #tpu.memory_space<vmem>>) attributes {dimension_semantics = [#tpu.dimension_semantics<parallel>], iteration_bounds = array<i64: 1>, scalar_prefetch = 0 : i64, scratch_operands = 0 : i64, tpu.core_type = #tpu.core_type<tc>, window_params = [{transform_indices = @transform_0, window_bounds = array<i64: 4, 128>}, {pipeline_mode = #tpu.pipeline_mode<synchronous>, transform_indices = @transform_1, window_bounds = array<i64: 1, 128>}, {transform_indices = @transform_2, window_bounds = array<i64: 4, 128>}]} {
    %c0 = arith.constant 0 : index
    %c0_0 = arith.constant 0 : index
    %0 = vector.load %arg1[%c0, %c0_0] : memref<4x128xf32, #tpu.memory_space<vmem>>, vector<4x128xf32>
    %c0_1 = arith.constant 0 : index
    %c0_2 = arith.constant 0 : index
    %1 = vector.load %arg2[%c0_1, %c0_2] : memref<1x128xf32, #tpu.memory_space<vmem>>, vector<1x128xf32>
    %2 = arith.mulf %0, %0 : vector<4x128xf32>
    %3 = vector.extract_strided_slice %2 {offsets = [0, 0], sizes = [4, 32], strides = [1, 1]} : vector<4x128xf32> to vector<4x32xf32>
    %cst = arith.constant dense<0.000000e+00> : vector<4xf32>
    %4 = vector.multi_reduction <add>, %3, %cst [1] : vector<4x32xf32> to vector<4xf32>
    %5 = vector.shape_cast %4 : vector<4xf32> to vector<4x1xf32>
    %cst_3 = arith.constant 3.125000e-02 : f32
    %6 = vector.broadcast %cst_3 : f32 to vector<4x1xf32>
    %7 = arith.mulf %5, %6 : vector<4x1xf32>
    %cst_4 = arith.constant 9.99999974E-6 : f32
    %8 = vector.broadcast %cst_4 : f32 to vector<4x1xf32>
    %9 = arith.addf %7, %8 : vector<4x1xf32>
    %10 = math.rsqrt %9 : vector<4x1xf32>
    %11 = vector.shape_cast %10 : vector<4x1xf32> to vector<4x1xf32>
    %12 = vector.broadcast %11 : vector<4x1xf32> to vector<4x32xf32>
    %13 = vector.extract_strided_slice %2 {offsets = [0, 32], sizes = [4, 32], strides = [1, 1]} : vector<4x128xf32> to vector<4x32xf32>
    %cst_5 = arith.constant dense<0.000000e+00> : vector<4xf32>
    %14 = vector.multi_reduction <add>, %13, %cst_5 [1] : vector<4x32xf32> to vector<4xf32>
    %15 = vector.shape_cast %14 : vector<4xf32> to vector<4x1xf32>
    %cst_6 = arith.constant 3.125000e-02 : f32
    %16 = vector.broadcast %cst_6 : f32 to vector<4x1xf32>
    %17 = arith.mulf %15, %16 : vector<4x1xf32>
    %cst_7 = arith.constant 9.99999974E-6 : f32
    %18 = vector.broadcast %cst_7 : f32 to vector<4x1xf32>
    %19 = arith.addf %17, %18 : vector<4x1xf32>
    %20 = math.rsqrt %19 : vector<4x1xf32>
    %21 = vector.shape_cast %20 : vector<4x1xf32> to vector<4x1xf32>
    %22 = vector.broadcast %21 : vector<4x1xf32> to vector<4x32xf32>
    %23 = vector.extract_strided_slice %2 {offsets = [0, 64], sizes = [4, 32], strides = [1, 1]} : vector<4x128xf32> to vector<4x32xf32>
    %cst_8 = arith.constant dense<0.000000e+00> : vector<4xf32>
    %24 = vector.multi_reduction <add>, %23, %cst_8 [1] : vector<4x32xf32> to vector<4xf32>
    %25 = vector.shape_cast %24 : vector<4xf32> to vector<4x1xf32>
    %cst_9 = arith.constant 3.125000e-02 : f32
    %26 = vector.broadcast %cst_9 : f32 to vector<4x1xf32>
    %27 = arith.mulf %25, %26 : vector<4x1xf32>
    %cst_10 = arith.constant 9.99999974E-6 : f32
    %28 = vector.broadcast %cst_10 : f32 to vector<4x1xf32>
    %29 = arith.addf %27, %28 : vector<4x1xf32>
    %30 = math.rsqrt %29 : vector<4x1xf32>
    %31 = vector.shape_cast %30 : vector<4x1xf32> to vector<4x1xf32>
    %32 = vector.broadcast %31 : vector<4x1xf32> to vector<4x32xf32>
    %33 = vector.extract_strided_slice %2 {offsets = [0, 96], sizes = [4, 32], strides = [1, 1]} : vector<4x128xf32> to vector<4x32xf32>
    %cst_11 = arith.constant dense<0.000000e+00> : vector<4xf32>
    %34 = vector.multi_reduction <add>, %33, %cst_11 [1] : vector<4x32xf32> to vector<4xf32>
    %35 = vector.shape_cast %34 : vector<4xf32> to vector<4x1xf32>
    %cst_12 = arith.constant 3.125000e-02 : f32
    %36 = vector.broadcast %cst_12 : f32 to vector<4x1xf32>
    %37 = arith.mulf %35, %36 : vector<4x1xf32>
    %cst_13 = arith.constant 9.99999974E-6 : f32
    %38 = vector.broadcast %cst_13 : f32 to vector<4x1xf32>
    %39 = arith.addf %37, %38 : vector<4x1xf32>
    %40 = math.rsqrt %39 : vector<4x1xf32>
    %41 = vector.shape_cast %40 : vector<4x1xf32> to vector<4x1xf32>
    %42 = vector.broadcast %41 : vector<4x1xf32> to vector<4x32xf32>
    %43 = tpu.concatenate %12, %22, %32, %42 in 1 : vector<4x32xf32>, vector<4x32xf32>, vector<4x32xf32>, vector<4x32xf32> -> vector<4x128xf32>
    %44 = arith.mulf %0, %43 : vector<4x128xf32>
    %45 = vector.broadcast %1 : vector<1x128xf32> to vector<4x128xf32>
    %46 = arith.mulf %44, %45 : vector<4x128xf32>
    %c0_14 = arith.constant 0 : index
    %c0_15 = arith.constant 0 : index
    %47 = vector.load %arg3[%c0_14, %c0_15] : memref<4x128xf32, #tpu.memory_space<vmem>>, vector<4x128xf32>
    tpu.vector_store %arg3[%c0_14, %c0_15], %46 {strides = array<i32>} : memref<4x128xf32, #tpu.memory_space<vmem>>, vector<4x128xf32>,
    return
  }
  func.func @transform_0(%arg0: i32) -> (i32, i32) {
    %c0_i32 = arith.constant 0 : i32
    %c0_i32_0 = arith.constant 0 : i32
    return %arg0, %c0_i32 : i32, i32
  }
  func.func @transform_1(%arg0: i32) -> (i32, i32) {
    %c0_i32 = arith.constant 0 : i32
    %c0_i32_0 = arith.constant 0 : i32
    %c0_i32_1 = arith.constant 0 : i32
    return %c0_i32, %c0_i32_0 : i32, i32
  }
  func.func @transform_2(%arg0: i32) -> (i32, i32) {
    %c0_i32 = arith.constant 0 : i32
    %c0_i32_0 = arith.constant 0 : i32
    return %arg0, %c0_i32 : i32, i32
  }
}

</mosaic_0001>

<llo_original>
// kernel: tpu_custom_call.1
$region0: #{tpu_custom_call.1}
  #allocation0 [shape = 'u32[]', space=smem, size = 0x4, offset = 0x4, fixed_abs, tag = 'smem constant byte address 0x4 - core index']
  #allocation1 [shape = 'u32[144,128]{1,0:T(1,128)}', space=vmem, size = 0x12000, scoped, tag = 'internal scratch']
  %s0 = inlined_call_operand.hbm [shape: f32[4,128], index: 0, kind: input, shape index: {}]
  %s1 = inlined_call_operand.vmem [shape: f32[1,128], index: 1, kind: input, shape index: {}]
  %s2 = inlined_call_operand.hbm [shape: f32[4,128], index: 2, kind: output, shape index: {}]
  %s3 = sld [smem:[#allocation0]]
  $region22: #{tpu_custom_call.1} parent=0
    _
  %s5 = ssub.s32 1, %s3
  %s6 = scalar_select 0, %s5, %s3
  $region1: #{tpu_custom_call.1} parent=0
    #allocation2 [shape = 'u8[2048]{0}', space=vmem, size = 0x800, scoped, tag = 'input window, operand 0, single buffered']
    #allocation3 [shape = 's32[1]{0}', space=sflag, size = 0x4, scoped, tag = 'scoped memory for tpu_custom_call.1']
    #allocation4 [shape = 's32[1]{0}', space=sflag, size = 0x4, scoped, tag = 'scoped memory for tpu_custom_call.1']
    #allocation5 [shape = 'u8[2048]{0}', space=vmem, size = 0x800, scoped, tag = 'output window, operand 0, single buffered']
    %7 = vsyncpa [#allocation3], 0
    %8 = vsyncpa [#allocation4], 0
    // Predicated region
    $region2: #{tpu_custom_call.1} parent=1 // pred_check
      _
    $region3: #{tpu_custom_call.1} parent=1 // pred_check_branch
      %10 = sbr.rel (0) target = $region5
    $region4: #{tpu_custom_call.1} parent=1 // pred_region
      %s12 = ssub.s32 64, 64
      %13 = vsyncadd [#allocation3], %s12
      %s15 = sshll.u32 [#allocation2], 4
      %s16 = int_to_ptr.vmem [resolvable:$true] %s15
      %18 = dma.hbm_to_vmem [thread:$0]  %s0, 64, %s16, [#allocation3]
    $region5: #{tpu_custom_call.1} parent=1 // pred_fallthru
      _
    // Predicated region
    $region6: #{tpu_custom_call.1} parent=1 // pred_check
      _
    $region7: #{tpu_custom_call.1} parent=1 // pred_check_branch
      %20 = sbr.rel (0) target = $region9
    $region8: #{tpu_custom_call.1} parent=1 // pred_region
      _
    $region9: #{tpu_custom_call.1} parent=1 // pred_fallthru
      _
    // Predicated region
    $region10: #{tpu_custom_call.1} parent=1 // pred_check
      _
    $region11: #{tpu_custom_call.1} parent=1 // pred_check_branch
      %22 = sbr.rel (0) target = $region13
    $region12: #{tpu_custom_call.1} parent=1 // pred_region
      %23 = dma.done [#allocation3], 64
    $region13: #{tpu_custom_call.1} parent=1 // pred_fallthru
      _
    %v24 = vld [vmem:[#allocation2] sm:$0xf]
    %v25 = vld [vmem:[%s1] sm:$0x1]
    %v26 = vmul.f32 %v24, %v24
    %vm27 = vcmask 257024
    %v28 = vsel %vm27, %v26, 0.0
    %29 = vadd.xlane.f32.xlu0 %v28
    %v30 = vpop.xlane.xlu0 %29
    %v31 = vmul.f32 %v30, 0.03125
    %v32 = vadd.f32 %v31, 1e-05
    %v33 = vrsqrt.pop %v32
    %35 = vrot.lane.b32.xlu0 %v26, 96
    %v36 = vpop.permute.xlu0 %35
    %v38 = vsel %vm27, %v36, 0.0
    %39 = vadd.xlane.f32.xlu0 %v38
    %v40 = vpop.xlane.xlu0 %39
    %v41 = vmul.f32 %v40, 0.03125
    %v42 = vadd.f32 %v41, 1e-05
    %v43 = vrsqrt.pop %v42
    %44 = vrot.lane.b32.xlu0 %v26, 64
    %v45 = vpop.permute.xlu0 %44
    %v47 = vsel %vm27, %v45, 0.0
    %48 = vadd.xlane.f32.xlu0 %v47
    %v49 = vpop.xlane.xlu0 %48
    %v50 = vmul.f32 %v49, 0.03125
    %v51 = vadd.f32 %v50, 1e-05
    %v52 = vrsqrt.pop %v51
    %53 = vrot.lane.b32.xlu0 %v26, 32
    %v54 = vpop.permute.xlu0 %53
    %v56 = vsel %vm27, %v54, 0.0
    %57 = vadd.xlane.f32.xlu0 %v56
    %v58 = vpop.xlane.xlu0 %57
    %v59 = vmul.f32 %v58, 0.03125
    %v60 = vadd.f32 %v59, 1e-05
    %v61 = vrsqrt.pop %v60
    %vm62 = vcmask 261120
    %v63 = vsel %vm62, %v33, %v43
    %vm64 = vcmask 523264
    %v65 = vsel %vm64, %v63, %v52
    %vm66 = vcmask 785408
    %v67 = vsel %vm66, %v65, %v61
    %v68 = vmul.f32 %v24, %v67
    %v70 = vlaneseq
    %v71 = vshrl.u32 %v70, 7
    %v72 = vsub.s32 0, %v71
    %v73 = vrot.slane %v25, %v72
    %v75 = vmul.f32 %v68, %v73
    %76 = vst [vmem:[#allocation5] sm:$0xf] %v75
    // Predicated region
    $region14: #{tpu_custom_call.1} parent=1 // pred_check
      _
    $region15: #{tpu_custom_call.1} parent=1 // pred_check_branch
      %78 = sbr.rel (0) target = $region17
    $region16: #{tpu_custom_call.1} parent=1 // pred_region
      %s80 = ssub.s32 64, 64
      %81 = vsyncadd [#allocation4], %s80
      %s83 = sshll.u32 [#allocation5], 4
      %s84 = int_to_ptr.vmem [resolvable:$true] %s83
      %86 = dma.vmem_to_hbm [thread:$0]  %s84, 64, %s2, [#allocation4]
    $region17: #{tpu_custom_call.1} parent=1 // pred_fallthru
      _
    // Predicated region
    $region18: #{tpu_custom_call.1} parent=1 // pred_check
      _
    $region19: #{tpu_custom_call.1} parent=1 // pred_check_branch
      %88 = sbr.rel (0) target = $region21
    $region20: #{tpu_custom_call.1} parent=1 // pred_region
      %89 = dma.done [#allocation4], 64
    $region21: #{tpu_custom_call.1} parent=1 // pred_fallthru
      _
    %90 = vsyncpa [#allocation3], 1
    %91 = vsyncpa [#allocation4], 1

</llo_original>
